<compile_context>
chip_gen: v5e
topology: v5e:2x2
jax: 0.10.0
libtpu: 0.0.40
codegen_flags: <defaults>
</compile_context>

<pallas_src>
import math
import functools

import numpy as np
import jax
import jax.numpy as jnp
from jax import lax
from jax.experimental import pallas as pl
from jax.experimental.pallas import tpu as pltpu

# Scoped-VMEM limit used for all pallas_calls: > the 16 MiB (v5e) / 32 MiB (v6e/v7x)
# defaults, < v7x's 64 MiB physical VMEM.
VMEM_LIMIT_BYTES = 48 * 1024 * 1024


# ----------------------------------------------------------------------------
# Kernel 1: fused Q/K/V projection (+ folded Performer scale and key/value mask)
#           + fused per-tile partial max of the key random-feature logits.
# ----------------------------------------------------------------------------
def qkv_kernel(x_ref, w_ref, b_ref, m_ref, projt_ref,
               q_ref, k_ref, v_ref, pmax_ref,
               *, hidden, scale, nh, rows_total):
    step = pl.program_id(0)
    tile_m = x_ref.shape[0]
    hd, _ = projt_ref.shape

    # y = x @ [Wq | Wk | Wv]^T + [bq | bk | bv]  -> (tile_m, 3H)
    # bf16 MXU operands, f32 accumulation.
    y = jnp.dot(x_ref[...], w_ref[...], preferred_element_type=jnp.float32) + b_ref[...]
    m = m_ref[...]                                         # (tile_m, 1) 0/1 mask (f32)
    q = y[:, :hidden] * scale
    k = y[:, hidden:2 * hidden] * (scale * m)
    v = y[:, 2 * hidden:] * m
    q_ref[...] = q.astype(q_ref.dtype)
    k_ref[...] = k.astype(k_ref.dtype)
    v_ref[...] = v.astype(v_ref.dtype)

    # Partial global max of the key random-feature logits for this row tile
    # (kept in f32 so it matches phase-A's f32 k_dash exactly).
    projt = projt_ref[...]                                 # (hd, M)
    row_max = None
    for h in range(nh):                                    # heads sliced in-register
        kd = jnp.dot(k[:, h * hd:(h + 1) * hd], projt,
                     preferred_element_type=jnp.float32)   # (tile_m, M)
        mh = jnp.max(kd, axis=-1, keepdims=True)           # (tile_m, 1)
        row_max = mh if row_max is None else jnp.maximum(row_max, mh)

    # grid-edge padding rows must not contribute to the global max
    row_ids = step * tile_m + lax.broadcasted_iota(jnp.int32, (tile_m, 1), 0)
    row_max = jnp.where(row_ids < rows_total, row_max, -jnp.inf)
    local = jnp.max(row_max, axis=0, keepdims=True)        # (1, 1)
    pmax_ref[...] = jnp.broadcast_to(local, pmax_ref.shape)


def qkv_projection(x2d, w_qkv_t, b_qkv, mask2d, projt, *, scale, nh, max_tile_m=512):
    BL, H = x2d.shape
    hd, M = projt.shape
    tile_m = BL if BL <= max_tile_m else max_tile_m
    n_tiles = pl.cdiv(BL, tile_m)
    row_spec = pl.BlockSpec((tile_m, H), lambda i: (i, 0))
    out_sds = jax.ShapeDtypeStruct((BL, H), jnp.float32)
    return pl.pallas_call(
        functools.partial(qkv_kernel, hidden=H, scale=scale, nh=nh, rows_total=BL),
        grid=(n_tiles,),
        in_specs=[row_spec,
                  pl.BlockSpec((H, 3 * H), lambda i: (0, 0)),
                  pl.BlockSpec((1, 3 * H), lambda i: (0, 0)),
                  pl.BlockSpec((tile_m, 1), lambda i: (i, 0)),
                  pl.BlockSpec((hd, M), lambda i: (0, 0))],
        out_specs=(row_spec, row_spec, row_spec,
                   pl.BlockSpec((8, 128), lambda i: (i, 0))),
        out_shape=(out_sds, out_sds, out_sds,
                   jax.ShapeDtypeStruct((n_tiles * 8, 128), jnp.float32)),
        compiler_params=pltpu.CompilerParams(
            dimension_semantics=("parallel",),
            vmem_limit_bytes=VMEM_LIMIT_BYTES),
    )(x2d, w_qkv_t, b_qkv, mask2d, projt)


# ----------------------------------------------------------------------------
# Kernel 2 (phase A): key random features -> k_cumsum (nh, M) and context (H, M),
#                     accumulated over L tiles in resident output blocks.
# ----------------------------------------------------------------------------
def context_kernel(k_ref, v_ref, projt_ref, kmax_ref, ctx_ref, ksum_ref,
                   *, nh, eps, seq_len):
    j = pl.program_id(1)
    tile_l = k_ref.shape[1]
    hd, M = projt_ref.shape
    ratio = M ** (-0.5)
    projt = projt_ref[...]                                 # (hd, M)
    kmax = kmax_ref[...]                                   # (1, 1) global key-logit max
    k = k_ref[0]                                           # (tile_l, H) scale+mask folded
    v = v_ref[0]                                           # (tile_l, H) mask folded

    if seq_len % tile_l != 0:                              # static: only if padding exists
        row_ids = j * tile_l + lax.broadcasted_iota(jnp.int32, (tile_l, 1), 0)
        row_valid = (row_ids < seq_len).astype(jnp.float32)
        k = k * row_valid                                  # keep exp() finite on pad rows
        v = v * row_valid
    else:
        row_valid = None

    ks_parts, ctx_parts = [], []
    for h in range(nh):                                    # heads sliced in-register
        sl = slice(h * hd, (h + 1) * hd)
        kh, vh = k[:, sl], v[:, sl]                        # (tile_l, hd)
        k_dash = jnp.dot(kh, projt, preferred_element_type=jnp.float32)   # (tile_l, M)
        diag_k = 0.5 * jnp.sum(kh * kh, axis=-1, keepdims=True)
        k_feat = ratio * (jnp.exp(k_dash - diag_k - kmax) + eps)          # f32
        if row_valid is not None:
            k_feat = k_feat * row_valid                    # pad rows contribute nothing
        ks_parts.append(jnp.sum(k_feat, axis=0, keepdims=True))           # (1, M)
        # context kept (hd, M) so nb_features stays on lanes; bf16 MXU, f32 accumulation
        ctx_parts.append(jnp.einsum('nd,nm->dm',
                                    vh.astype(jnp.bfloat16),
                                    k_feat.astype(jnp.bfloat16),
                                    preferred_element_type=jnp.float32))  # (hd, M)

    new_ksum = jnp.concatenate(ks_parts, axis=0)           # (nh, M)
    new_ctx = jnp.concatenate(ctx_parts, axis=0)           # (H, M)

    @pl.when(j == 0)
    def _():
        ksum_ref[0] = new_ksum
        ctx_ref[0] = new_ctx

    @pl.when(j > 0)
    def _():
        ksum_ref[0] = ksum_ref[0] + new_ksum
        ctx_ref[0] = ctx_ref[0] + new_ctx


def performer_context(k, v, projt, kmax, *, nh, eps=1e-4, max_tile_l=512):
    B, L, H = k.shape
    hd, M = projt.shape
    tile_l = L if L <= max_tile_l else max_tile_l
    n_l = pl.cdiv(L, tile_l)
    kv_spec = pl.BlockSpec((1, tile_l, H), lambda b, j: (b, j, 0))
    return pl.pallas_call(
        functools.partial(context_kernel, nh=nh, eps=eps, seq_len=L),
        grid=(B, n_l),
        in_specs=[kv_spec, kv_spec,
                  pl.BlockSpec((hd, M), lambda b, j: (0, 0)),
                  pl.BlockSpec((1, 1), lambda b, j: (0, 0))],
        out_specs=(pl.BlockSpec((1, H, M), lambda b, j: (b, 0, 0)),
                   pl.BlockSpec((1, nh, M), lambda b, j: (b, 0, 0))),
        out_shape=(jax.ShapeDtypeStruct((B, H, M), jnp.float32),
                   jax.ShapeDtypeStruct((B, nh, M), jnp.float32)),
        compiler_params=pltpu.CompilerParams(
            dimension_semantics=("parallel", "arbitrary"),
            vmem_limit_bytes=VMEM_LIMIT_BYTES),
    )(k, v, projt, kmax)


# ----------------------------------------------------------------------------
# Kernel 3 (phase B): query random features + q_feat @ context + d_inv, per L tile.
# ----------------------------------------------------------------------------
def output_kernel(q_ref, projt_ref, ctx_ref, ksum_ref, o_ref, *, nh, eps):
    hd, M = projt_ref.shape
    ratio = M ** (-0.5)
    projt = projt_ref[...]                                 # (hd, M)
    q = q_ref[0]                                           # (tile_l, H) scale folded
    ctx = ctx_ref[0]                                       # (H, M)
    ksum = ksum_ref[0]                                     # (nh, M)

    outs = []
    for h in range(nh):                                    # heads sliced in-register
        sl = slice(h * hd, (h + 1) * hd)
        qh = q[:, sl]                                      # (tile_l, hd)
        q_dash = jnp.dot(qh, projt, preferred_element_type=jnp.float32)   # (tile_l, M)
        diag_q = 0.5 * jnp.sum(qh * qh, axis=-1, keepdims=True)
        q_feat = ratio * (jnp.exp(q_dash - diag_q
                                  - jnp.max(q_dash, axis=-1, keepdims=True)) + eps)
        denom = jnp.sum(q_feat * ksum[h:h + 1, :], axis=-1, keepdims=True)  # (tile_l, 1)
        d_inv = pl.reciprocal(denom, approx=True)
        out_h = jnp.einsum('nm,dm->nd',
                           q_feat.astype(jnp.bfloat16),
                           ctx[sl, :].astype(jnp.bfloat16),
                           preferred_element_type=jnp.float32)            # (tile_l, hd)
        outs.append(out_h * d_inv)

    # one lane-dense (tile_l, H) store — already in combined-heads layout
    o_ref[0] = jnp.concatenate(outs, axis=-1).astype(o_ref.dtype)


def performer_output(q, projt, ctx, ksum, *, nh, eps=1e-4, max_tile_l=512):
    B, L, H = q.shape
    hd, M = projt.shape
    tile_l = L if L <= max_tile_l else max_tile_l
    n_l = pl.cdiv(L, tile_l)
    q_spec = pl.BlockSpec((1, tile_l, H), lambda b, i: (b, i, 0))
    return pl.pallas_call(
        functools.partial(output_kernel, nh=nh, eps=eps),
        grid=(B, n_l),
        in_specs=[q_spec,
                  pl.BlockSpec((hd, M), lambda b, i: (0, 0)),
                  pl.BlockSpec((1, H, M), lambda b, i: (b, 0, 0)),
                  pl.BlockSpec((1, nh, M), lambda b, i: (b, 0, 0))],
        out_specs=q_spec,
        out_shape=jax.ShapeDtypeStruct((B, L, H), jnp.float32),
        compiler_params=pltpu.CompilerParams(
            dimension_semantics=("parallel", "parallel"),
            vmem_limit_bytes=VMEM_LIMIT_BYTES),
    )(q, projt, ctx, ksum)


# ----------------------------------------------------------------------------
# Full Attention module forward (thin JAX glue: reshapes + one tiny max only)
# ----------------------------------------------------------------------------
def attention_forward(params, x, mask):
    B, L, H = x.shape
    nh = params["num_heads"]
    hd = H // nh
    # folded scale: Q/sqrt(sqrt(hd)) in the module * data_normalizer hd**-0.25 in FAVOR+
    scale = float(hd) ** -0.5

    x2d = x.reshape(B * L, H).astype(jnp.bfloat16)         # bf16 MXU input
    mask2d = mask.reshape(B * L, 1).astype(jnp.float32)

    q2d, k2d, v2d, pmax = qkv_projection(x2d, params["w_qkv_t"], params["b_qkv"],
                                         mask2d, params["proj_t"], scale=scale, nh=nh)
    kmax = jnp.max(pmax).reshape(1, 1)                     # tiny JAX reduce over tiles

    ctx, ksum = performer_context(k2d.reshape(B, L, H), v2d.reshape(B, L, H),
                                  params["proj_t"], kmax, nh=nh)
    out = performer_output(q2d.reshape(B, L, H), params["proj_t"], ctx, ksum, nh=nh)
    return out.astype(x.dtype)


# ----------------------------------------------------------------------------
# Deterministic random-feature matrix init (mirrors module __init__; plain JAX)
# ----------------------------------------------------------------------------
def gaussian_orthogonal_random_matrix(key, nb_rows, nb_cols):
    nb_full_blocks = nb_rows // nb_cols
    keys = jax.random.split(key, nb_full_blocks + 2)
    blocks = []
    for i in range(nb_full_blocks):
        g = jax.random.normal(keys[i], (nb_cols, nb_cols), jnp.float32)
        qm, _ = jnp.linalg.qr(g)
        blocks.append(qm.T)
    rem = nb_rows - nb_full_blocks * nb_cols
    if rem > 0:
        g = jax.random.normal(keys[-2], (nb_cols, nb_cols), jnp.float32)
        qm, _ = jnp.linalg.qr(g)
        blocks.append(qm.T[:rem])
    mat = jnp.concatenate(blocks, axis=0)
    multiplier = jnp.linalg.norm(
        jax.random.normal(keys[-1], (nb_rows, nb_cols), jnp.float32), axis=1)
    return mat * multiplier[:, None]


# ----------------------------------------------------------------------------
# Pure-JAX reference (literal transcription of the PyTorch forward)
# ----------------------------------------------------------------------------
def reference_forward(x, mask, wq, wk, wv, bq, bk, bv, proj, nh):
    B, L, H = x.shape
    hd = H // nh

    def lin_split(w, b):
        y = x @ w.T + b
        return y.reshape(B, L, nh, hd).transpose(0, 2, 1, 3)

    Q, K, V = lin_split(wq, bq), lin_split(wk, bk), lin_split(wv, bv)
    scale = math.sqrt(math.sqrt(hd))
    q = Q / scale
    k = K / scale * mask[:, None, :, None]
    v = V * mask[:, None, :, None]

    data_normalizer = hd ** (-0.25)
    ratio = proj.shape[0] ** (-0.5)
    eps = 1e-4
    q_dash = jnp.einsum('bhnd,md->bhnm', data_normalizer * q, proj)
    k_dash = jnp.einsum('bhnd,md->bhnm', data_normalizer * k, proj)
    diag_q = (q ** 2).sum(-1, keepdims=True) / 2.0 * data_normalizer ** 2
    diag_k = (k ** 2).sum(-1, keepdims=True) / 2.0 * data_normalizer ** 2
    qf = ratio * (jnp.exp(q_dash - diag_q - q_dash.max(-1, keepdims=True)) + eps)
    kf = ratio * (jnp.exp(k_dash - diag_k - k_dash.max()) + eps)

    k_cum = kf.sum(-2)
    d_inv = 1.0 / jnp.einsum('bhnm,bhm->bhn', qf, k_cum)
    context = jnp.einsum('bhnm,bhnd->bhmd', kf, v)
    out = jnp.einsum('bhmd,bhnm,bhn->bhnd', context, qf, d_inv)
    return out.transpose(0, 2, 1, 3).reshape(B, L, H)


if __name__ == "__main__":
    B, L, hidden, num_heads, rp_dim = 2, 8, 32, 2, 32
    head_dim = hidden // num_heads

    key = jax.random.PRNGKey(0)
    ks = jax.random.split(key, 10)
    x = jax.random.normal(ks[0], (B, L, hidden), jnp.float32)
    mask = (jax.random.uniform(ks[1], (B, L)) > 0.2).astype(jnp.float32)

    wq = 0.05 * jax.random.normal(ks[2], (hidden, hidden), jnp.float32)  # torch Linear: (out, in)
    wk = 0.05 * jax.random.normal(ks[3], (hidden, hidden), jnp.float32)
    wv = 0.05 * jax.random.normal(ks[4], (hidden, hidden), jnp.float32)
    bq = 0.01 * jax.random.normal(ks[5], (hidden,), jnp.float32)
    bk = 0.01 * jax.random.normal(ks[6], (hidden,), jnp.float32)
    bv = 0.01 * jax.random.normal(ks[7], (hidden,), jnp.float32)
    proj = gaussian_orthogonal_random_matrix(ks[8], rp_dim, head_dim)    # (rp_dim, head_dim)

    params = dict(
        num_heads=num_heads,
        # fused, pre-transposed QKV weight (H, 3H) stored in bf16 (MXU input), bias f32
        w_qkv_t=jnp.concatenate([wq.T, wk.T, wv.T], axis=1).astype(jnp.bfloat16),
        b_qkv=jnp.concatenate([bq, bk, bv]).reshape(1, 3 * hidden).astype(jnp.float32),
        proj_t=proj.T.astype(jnp.float32),                 # (head_dim, rp_dim)
    )

    out = attention_forward(params, x, mask)
    out = jax.block_until_ready(out)

    ref = reference_forward(x, mask, wq, wk, wv, bq, bk, bv, proj, num_heads)
    np.testing.assert_allclose(np.asarray(out), np.asarray(ref), rtol=1e-2, atol=1e-2)

    print("KERNEL_OK")
</pallas_src>

<mosaic_0001>
module attributes {stable_mosaic.version = 11 : i64} {
  func.func @qkv_kernel(%arg0: i32, %arg1: memref<16x32xbf16, #tpu.memory_space<vmem>>, %arg2: memref<32x96xbf16, #tpu.memory_space<vmem>>, %arg3: memref<1x96xf32, #tpu.memory_space<vmem>>, %arg4: memref<16x1xf32, #tpu.memory_space<vmem>>, %arg5: memref<16x32xf32, #tpu.memory_space<vmem>>, %arg6: memref<16x32xf32, #tpu.memory_space<vmem>>, %arg7: memref<16x32xf32, #tpu.memory_space<vmem>>, %arg8: memref<16x32xf32, #tpu.memory_space<vmem>>, %arg9: memref<8x128xf32, #tpu.memory_space<vmem>>) attributes {dimension_semantics = [#tpu.dimension_semantics<parallel>], iteration_bounds = array<i64: 1>, scalar_prefetch = 0 : i64, scratch_operands = 0 : i64, tpu.core_type = #tpu.core_type<tc>, window_params = [{transform_indices = @transform_0, window_bounds = array<i64: 16, 32>}, {pipeline_mode = #tpu.pipeline_mode<synchronous>, transform_indices = @transform_1, window_bounds = array<i64: 32, 96>}, {pipeline_mode = #tpu.pipeline_mode<synchronous>, transform_indices = @transform_2, window_bounds = array<i64: 1, 96>}, {transform_indices = @transform_3, window_bounds = array<i64: 16, 1>}, {pipeline_mode = #tpu.pipeline_mode<synchronous>, transform_indices = @transform_4, window_bounds = array<i64: 16, 32>}, {transform_indices = @transform_5, window_bounds = array<i64: 16, 32>}, {transform_indices = @transform_6, window_bounds = array<i64: 16, 32>}, {transform_indices = @transform_7, window_bounds = array<i64: 16, 32>}, {transform_indices = @transform_8, window_bounds = array<i64: 8, 128>}]} {
    %c0 = arith.constant 0 : index
    %c0_0 = arith.constant 0 : index
    %0 = vector.load %arg1[%c0, %c0_0] : memref<16x32xbf16, #tpu.memory_space<vmem>>, vector<16x32xbf16>
    %c0_1 = arith.constant 0 : index
    %c0_2 = arith.constant 0 : index
    %1 = vector.load %arg2[%c0_1, %c0_2] : memref<32x96xbf16, #tpu.memory_space<vmem>>, vector<32x96xbf16>
    %cst = arith.constant dense<0.000000e+00> : vector<16x96xf32>
    %2 = tpu.matmul %0, %1, %cst {dimension_numbers = #tpu.dot_dimension_numbers<[1], [0], [0], [1], [0, 0, 1, 1], [], []>} : vector<16x32xbf16>, vector<32x96xbf16>, vector<16x96xf32> -> vector<16x96xf32>
    %c0_3 = arith.constant 0 : index
    %c0_4 = arith.constant 0 : index
    %3 = vector.load %arg3[%c0_3, %c0_4] : memref<1x96xf32, #tpu.memory_space<vmem>>, vector<1x96xf32>
    %4 = vector.broadcast %3 : vector<1x96xf32> to vector<16x96xf32>
    %5 = arith.addf %2, %4 : vector<16x96xf32>
    %c0_5 = arith.constant 0 : index
    %c0_6 = arith.constant 0 : index
    %6 = vector.load %arg4[%c0_5, %c0_6] : memref<16x1xf32, #tpu.memory_space<vmem>>, vector<16x1xf32>
    %7 = vector.extract_strided_slice %5 {offsets = [0, 0], sizes = [16, 32], strides = [1, 1]} : vector<16x96xf32> to vector<16x32xf32>
    %cst_7 = arith.constant 2.500000e-01 : f32
    %8 = vector.broadcast %cst_7 : f32 to vector<16x32xf32>
    %9 = arith.mulf %7, %8 : vector<16x32xf32>
    %10 = vector.extract_strided_slice %5 {offsets = [0, 32], sizes = [16, 32], strides = [1, 1]} : vector<16x96xf32> to vector<16x32xf32>
    %cst_8 = arith.constant 2.500000e-01 : f32
    %11 = vector.broadcast %cst_8 : f32 to vector<16x1xf32>
    %12 = arith.mulf %11, %6 : vector<16x1xf32>
    %13 = vector.broadcast %12 : vector<16x1xf32> to vector<16x32xf32>
    %14 = arith.mulf %10, %13 : vector<16x32xf32>
    %15 = vector.extract_strided_slice %5 {offsets = [0, 64], sizes = [16, 32], strides = [1, 1]} : vector<16x96xf32> to vector<16x32xf32>
    %16 = vector.broadcast %6 : vector<16x1xf32> to vector<16x32xf32>
    %17 = arith.mulf %15, %16 : vector<16x32xf32>
    %c0_9 = arith.constant 0 : index
    %c0_10 = arith.constant 0 : index
    %18 = vector.load %arg6[%c0_9, %c0_10] : memref<16x32xf32, #tpu.memory_space<vmem>>, vector<16x32xf32>
    tpu.vector_store %arg6[%c0_9, %c0_10], %9 {strides = array<i32>} : memref<16x32xf32, #tpu.memory_space<vmem>>, vector<16x32xf32>,
    %c0_11 = arith.constant 0 : index
    %c0_12 = arith.constant 0 : index
    %19 = vector.load %arg7[%c0_11, %c0_12] : memref<16x32xf32, #tpu.memory_space<vmem>>, vector<16x32xf32>
    tpu.vector_store %arg7[%c0_11, %c0_12], %14 {strides = array<i32>} : memref<16x32xf32, #tpu.memory_space<vmem>>, vector<16x32xf32>,
    %c0_13 = arith.constant 0 : index
    %c0_14 = arith.constant 0 : index
    %20 = vector.load %arg8[%c0_13, %c0_14] : memref<16x32xf32, #tpu.memory_space<vmem>>, vector<16x32xf32>
    tpu.vector_store %arg8[%c0_13, %c0_14], %17 {strides = array<i32>} : memref<16x32xf32, #tpu.memory_space<vmem>>, vector<16x32xf32>,
    %c0_15 = arith.constant 0 : index
    %c0_16 = arith.constant 0 : index
    %21 = vector.load %arg5[%c0_15, %c0_16] : memref<16x32xf32, #tpu.memory_space<vmem>>, vector<16x32xf32>
    %22 = vector.extract_strided_slice %14 {offsets = [0, 0], sizes = [16, 16], strides = [1, 1]} : vector<16x32xf32> to vector<16x16xf32>
    %cst_17 = arith.constant dense<0.000000e+00> : vector<16x32xf32>
    %23 = tpu.matmul %22, %21, %cst_17 {dimension_numbers = #tpu.dot_dimension_numbers<[1], [0], [0], [1], [0, 0, 1, 1], [], []>} : vector<16x16xf32>, vector<16x32xf32>, vector<16x32xf32> -> vector<16x32xf32>
    %cst_18 = arith.constant dense<0xFF800000> : vector<16xf32>
    %24 = vector.multi_reduction <maximumf>, %23, %cst_18 [1] : vector<16x32xf32> to vector<16xf32>
    %25 = vector.shape_cast %24 : vector<16xf32> to vector<16x1xf32>
    %26 = vector.extract_strided_slice %14 {offsets = [0, 16], sizes = [16, 16], strides = [1, 1]} : vector<16x32xf32> to vector<16x16xf32>
    %cst_19 = arith.constant dense<0.000000e+00> : vector<16x32xf32>
    %27 = tpu.matmul %26, %21, %cst_19 {dimension_numbers = #tpu.dot_dimension_numbers<[1], [0], [0], [1], [0, 0, 1, 1], [], []>} : vector<16x16xf32>, vector<16x32xf32>, vector<16x32xf32> -> vector<16x32xf32>
    %cst_20 = arith.constant dense<0xFF800000> : vector<16xf32>
    %28 = vector.multi_reduction <maximumf>, %27, %cst_20 [1] : vector<16x32xf32> to vector<16xf32>
    %29 = vector.shape_cast %28 : vector<16xf32> to vector<16x1xf32>
    %30 = arith.maximumf %25, %29 : vector<16x1xf32>
    %c16_i32 = arith.constant 16 : i32
    %31 = arith.muli %arg0, %c16_i32 : i32
    %32 = tpu.iota {dimensions = array<i32: 0>} : vector<16x1xi32>
    %33 = vector.broadcast %31 : i32 to vector<16x1xi32>
    %34 = arith.addi %33, %32 : vector<16x1xi32>
    %c16_i32_21 = arith.constant 16 : i32
    %35 = vector.broadcast %c16_i32_21 : i32 to vector<16x1xi32>
    %36 = arith.cmpi slt, %34, %35 : vector<16x1xi32>
    %cst_22 = arith.constant 0xFF800000 : f32
    %37 = vector.broadcast %cst_22 : f32 to vector<16x1xf32>
    %38 = arith.select %36, %30, %37 : vector<16x1xi1>, vector<16x1xf32>
    %cst_23 = arith.constant dense<0xFF800000> : vector<1xf32>
    %39 = vector.multi_reduction <maximumf>, %38, %cst_23 [0] : vector<16x1xf32> to vector<1xf32>
    %40 = vector.shape_cast %39 : vector<1xf32> to vector<1x1xf32>
    %41 = vector.shape_cast %40 : vector<1x1xf32> to vector<1x1xf32>
    %42 = vector.broadcast %41 : vector<1x1xf32> to vector<8x128xf32>
    %c0_24 = arith.constant 0 : index
    %c0_25 = arith.constant 0 : index
    %43 = vector.load %arg9[%c0_24, %c0_25] : memref<8x128xf32, #tpu.memory_space<vmem>>, vector<8x128xf32>
    tpu.vector_store %arg9[%c0_24, %c0_25], %42 {strides = array<i32>} : memref<8x128xf32, #tpu.memory_space<vmem>>, vector<8x128xf32>,
    return
  }
  func.func @transform_0(%arg0: i32) -> (i32, i32) {
    %c0_i32 = arith.constant 0 : i32
    %c0_i32_0 = arith.constant 0 : i32
    return %arg0, %c0_i32 : i32, i32
  }
  func.func @transform_1(%arg0: i32) -> (i32, i32) {
    %c0_i32 = arith.constant 0 : i32
    %c0_i32_0 = arith.constant 0 : i32
    %c0_i32_1 = arith.constant 0 : i32
    return %c0_i32, %c0_i32_0 : i32, i32
  }
  func.func @transform_2(%arg0: i32) -> (i32, i32) {
    %c0_i32 = arith.constant 0 : i32
    %c0_i32_0 = arith.constant 0 : i32
    %c0_i32_1 = arith.constant 0 : i32
    return %c0_i32, %c0_i32_0 : i32, i32
  }
  func.func @transform_3(%arg0: i32) -> (i32, i32) {
    %c0_i32 = arith.constant 0 : i32
    %c0_i32_0 = arith.constant 0 : i32
    return %arg0, %c0_i32 : i32, i32
  }
  func.func @transform_4(%arg0: i32) -> (i32, i32) {
    %c0_i32 = arith.constant 0 : i32
    %c0_i32_0 = arith.constant 0 : i32
    %c0_i32_1 = arith.constant 0 : i32
    return %c0_i32, %c0_i32_0 : i32, i32
  }
  func.func @transform_5(%arg0: i32) -> (i32, i32) {
    %c0_i32 = arith.constant 0 : i32
    %c0_i32_0 = arith.constant 0 : i32
    return %arg0, %c0_i32 : i32, i32
  }
  func.func @transform_6(%arg0: i32) -> (i32, i32) {
    %c0_i32 = arith.constant 0 : i32
    %c0_i32_0 = arith.constant 0 : i32
    return %arg0, %c0_i32 : i32, i32
  }
  func.func @transform_7(%arg0: i32) -> (i32, i32) {
    %c0_i32 = arith.constant 0 : i32
    %c0_i32_0 = arith.constant 0 : i32
    return %arg0, %c0_i32 : i32, i32
  }
  func.func @transform_8(%arg0: i32) -> (i32, i32) {
    %c0_i32 = arith.constant 0 : i32
    %c0_i32_0 = arith.constant 0 : i32
    return %arg0, %c0_i32 : i32, i32
  }
}

</mosaic_0001>

<llo_original>
// kernel: tpu_custom_call.1
$region0: #{tpu_custom_call.1}
  #allocation0 [shape = 'u32[]', space=smem, size = 0x4, offset = 0x4, fixed_abs, tag = 'smem constant byte address 0x4 - core index']
  #allocation1 [shape = 'u32[72,128]{1,0:T(1,128)}', space=vmem, size = 0x9000, scoped, tag = 'internal scratch']
  %s0 = inlined_call_operand.hbm [shape: bf16[16,32], index: 0, kind: input, shape index: {}]
  %s1 = inlined_call_operand.vmem [shape: bf16[32,96], index: 1, kind: input, shape index: {}]
  %s2 = inlined_call_operand.vmem [shape: f32[1,96], index: 2, kind: input, shape index: {}]
  %s3 = inlined_call_operand.vmem [shape: f32[16,1], index: 3, kind: input, shape index: {}]
  %s4 = inlined_call_operand.hbm [shape: f32[16,32], index: 4, kind: input, shape index: {}]
  %s5 = inlined_call_operand.hbm [shape: f32[16,32], index: 5, kind: output, shape index: {0}]
  %s6 = inlined_call_operand.hbm [shape: f32[16,32], index: 6, kind: output, shape index: {1}]
  %s7 = inlined_call_operand.hbm [shape: f32[16,32], index: 7, kind: output, shape index: {2}]
  %s8 = inlined_call_operand.hbm [shape: f32[8,128], index: 8, kind: output, shape index: {3}]
  %9 = xla_tuple %s5, %s6, %s7, %s8
  %s10 = sld [smem:[#allocation0]]
  $region62: #{tpu_custom_call.1} parent=0
    _
  %s12 = ssub.s32 1, %s10
  %s13 = scalar_select 0, %s12, %s10
  $region1: #{tpu_custom_call.1} parent=0
    #allocation2 [shape = 'u8[4096]{0}', space=vmem, size = 0x1000, scoped, tag = 'input window, operand 0, single buffered']
    #allocation3 [shape = 's32[1]{0}', space=sflag, size = 0x4, scoped, tag = 'scoped memory for tpu_custom_call.1']
    #allocation4 [shape = 's32[1]{0}', space=sflag, size = 0x4, scoped, tag = 'scoped memory for tpu_custom_call.1']
    #allocation5 [shape = 'u8[8192]{0}', space=vmem, size = 0x2000, scoped, tag = 'input window, operand 4, single buffered']
    #allocation6 [shape = 's32[1]{0}', space=sflag, size = 0x4, scoped, tag = 'scoped memory for tpu_custom_call.1']
    #allocation7 [shape = 'u8[8192]{0}', space=vmem, size = 0x2000, scoped, tag = 'output window, operand 0, single buffered']
    #allocation8 [shape = 'u8[8192]{0}', space=vmem, size = 0x2000, scoped, tag = 'output window, operand 1, single buffered']
    #allocation9 [shape = 's32[1]{0}', space=sflag, size = 0x4, scoped, tag = 'scoped memory for tpu_custom_call.1']
    #allocation10 [shape = 'u8[8192]{0}', space=vmem, size = 0x2000, scoped, tag = 'output window, operand 2, single buffered']
    #allocation11 [shape = 'u8[4096]{0}', space=vmem, size = 0x1000, scoped, tag = 'output window, operand 3, single buffered']
    #allocation12 [shape = 's32[1]{0}', space=sflag, size = 0x4, scoped, tag = 'scoped memory for tpu_custom_call.1']
    %14 = vsyncpa [#allocation3], 0
    %15 = vsyncpa [#allocation6], 0
    %16 = vsyncpa [#allocation4], 0
    %17 = vsyncpa [#allocation9], 0
    %18 = vsyncpa [#allocation12], 0
    // Predicated region
    $region2: #{tpu_custom_call.1} parent=1 // pred_check
      _
    $region3: #{tpu_custom_call.1} parent=1 // pred_check_branch
      %20 = sbr.rel (0) target = $region5
    $region4: #{tpu_custom_call.1} parent=1 // pred_region
      %22 = vsyncadd [#allocation3], 0
      %s23 = sshll.u32 %s0, 4
      %s24 = int_to_ptr.hbm [resolvable:$true] %s23
      %s25 = sshll.u32 [#allocation2], 4
      %s26 = int_to_ptr.vmem [resolvable:$true] %s25
      %31 = dma.hbm_to_vmem [thread:$0]  %s24, 128, %s26, [#allocation3], 64, 64, 4
    $region5: #{tpu_custom_call.1} parent=1 // pred_fallthru
      _
    // Predicated region
    $region6: #{tpu_custom_call.1} parent=1 // pred_check
      _
    $region7: #{tpu_custom_call.1} parent=1 // pred_check_branch
      %33 = sbr.rel (0) target = $region9
    $region8: #{tpu_custom_call.1} parent=1 // pred_region
      _
    $region9: #{tpu_custom_call.1} parent=1 // pred_fallthru
      _
    // Predicated region
    $region10: #{tpu_custom_call.1} parent=1 // pred_check
      _
    $region11: #{tpu_custom_call.1} parent=1 // pred_check_branch
      %35 = sbr.rel (0) target = $region13
    $region12: #{tpu_custom_call.1} parent=1 // pred_region
      _
    $region13: #{tpu_custom_call.1} parent=1 // pred_fallthru
      _
    // Predicated region
    $region14: #{tpu_custom_call.1} parent=1 // pred_check
      _
    $region15: #{tpu_custom_call.1} parent=1 // pred_check_branch
      %37 = sbr.rel (0) target = $region17
    $region16: #{tpu_custom_call.1} parent=1 // pred_region
      _
    $region17: #{tpu_custom_call.1} parent=1 // pred_fallthru
      _
    // Predicated region
    $region18: #{tpu_custom_call.1} parent=1 // pred_check
      _
    $region19: #{tpu_custom_call.1} parent=1 // pred_check_branch
      %39 = sbr.rel (0) target = $region21
    $region20: #{tpu_custom_call.1} parent=1 // pred_region
      %41 = vsyncadd [#allocation6], 0
      %s42 = sshll.u32 %s4, 4
      %s43 = int_to_ptr.hbm [resolvable:$true] %s42
      %s44 = sshll.u32 [#allocation5], 4
      %s45 = int_to_ptr.vmem [resolvable:$true] %s44
      %50 = dma.hbm_to_vmem [thread:$0]  %s43, 256, %s45, [#allocation6], 128, 128, 8
    $region21: #{tpu_custom_call.1} parent=1 // pred_fallthru
      _
    // Predicated region
    $region22: #{tpu_custom_call.1} parent=1 // pred_check
      _
    $region23: #{tpu_custom_call.1} parent=1 // pred_check_branch
      %52 = sbr.rel (0) target = $region25
    $region24: #{tpu_custom_call.1} parent=1 // pred_region
      %54 = dma.done [#allocation3], 128
    $region25: #{tpu_custom_call.1} parent=1 // pred_fallthru
      _
    // Predicated region
    $region26: #{tpu_custom_call.1} parent=1 // pred_check
      _
    $region27: #{tpu_custom_call.1} parent=1 // pred_check_branch
      %56 = sbr.rel (0) target = $region29
    $region28: #{tpu_custom_call.1} parent=1 // pred_region
      %58 = dma.done [#allocation6], 256
    $region29: #{tpu_custom_call.1} parent=1 // pred_fallthru
      _
    %v60 = vld [vmem:[#allocation2] sm:$0xf]
    %v61 = vld [vmem:[#allocation2 + $0x4] sm:$0xf]
    %v62 = vld [vmem:[%s1] sm:$0xf]
    %v63 = vld [vmem:[%s1 + $0x4] sm:$0xf]
    %v64 = vld [vmem:[%s1 + $0x8] sm:$0xf]
    %v65 = vld [vmem:[%s1 + $0xc] sm:$0xf]
    %v66 = vld [vmem:[%s2] sm:$0x1]
    %v68 = vperm.slane %v66, 0
    %v72 = vunpack.c.l.b16 %v60
    %v73 = vunpack.c.l.b16 %v61
    %v74 = vpack.c.b16 %v73, %v72
    %v79 = vunpack.c.l.b16 %v62
    %v80 = vunpack.c.l.b16 %v63
    %v81 = vunpack.c.l.b16 %v64
    %v82 = vunpack.c.l.b16 %v65
    %v83 = vpack.c.b16 %v80, %v79
    %v84 = vpack.c.b16 %v82, %v81
    %vm87 = vcmask 261120
    %v89 = vsel %vm87, %v74, 0
    %91 = vmatpush.bf16.msra.mxu0 0
    %92 = vmatpush.bf16.msra.mxu0 0
    %93 = vmatpush.bf16.msra.mxu0 0
    %94 = vmatpush.bf16.msra.mxu0 0
    %95 = vmatpush.bf16.msra.mxu0 0
    %96 = vmatpush.bf16.msra.mxu0 0
    %97 = vmatpush.bf16.msra.mxu0 %v84
    %98 = vmatpush.bf16.msra.mxu0 %v83
    %99 = vmatmul.bf16.gmra.mxu0 %v89
    %v100 = vpop.f32.mrf.mxu0
    %v101 = vadd.f32 %v68, %v100
    %v102 = vpop.f32.mrf.mxu0
    %v103 = vadd.f32 %v68, %v102
    %104 = vdwg.mxu0
    %v105 = vld [vmem:[%s3] sm:$0xff]
    %v106 = vld [vmem:[%s3 + $0x8] sm:$0xff]
    %v107 = vmul.f32 %v101, 0.25
    %v108 = vmul.f32 %v103, 0.25
    %v109 = vmul.f32 %v105, 0.25
    %v110 = vmul.f32 %v106, 0.25
    %112 = vset.pattern.permute.xlu0 0
    %113 = vperm.xlu0 %112, %v109
    %v114 = vpop.permute.xlu0 %113
    %117 = vset.pattern.permute.xlu0 0
    %118 = vperm.xlu0 %117, %v110
    %v119 = vpop.permute.xlu0 %118
    %v121 = vmul.f32 %v101, %v114
    %v122 = vmul.f32 %v103, %v119
    %124 = vset.pattern.permute.xlu0 0
    %125 = vperm.xlu0 %124, %v105
    %v126 = vpop.permute.xlu0 %125
    %129 = vset.pattern.permute.xlu0 0
    %130 = vperm.xlu0 %129, %v106
    %v131 = vpop.permute.xlu0 %130
    %v133 = vmul.f32 %v101, %v126
    %v134 = vmul.f32 %v103, %v131
    %135 = vst.msk [vmem:[#allocation7] sm:$0xff] %vm87, %v107
    %136 = vst.msk [vmem:[#allocation7 + $0x8] sm:$0xff] %vm87, %v108
    %139 = vrot.lane.b32.xlu0 %v121, 96
    %v140 = vpop.permute.xlu0 %139
    %141 = vrot.lane.b32.xlu0 %v122, 96
    %v142 = vpop.permute.xlu0 %141
    %145 = vst.msk [vmem:[#allocation8] sm:$0xff] %vm87, %v140
    %146 = vst.msk [vmem:[#allocation8 + $0x8] sm:$0xff] %vm87, %v142
    %149 = vrot.lane.b32.xlu0 %v133, 64
    %v150 = vpop.permute.xlu0 %149
    %151 = vrot.lane.b32.xlu0 %v134, 64
    %v152 = vpop.permute.xlu0 %151
    %155 = vst.msk [vmem:[#allocation10] sm:$0xff] %vm87, %v150
    %156 = vst.msk [vmem:[#allocation10 + $0x8] sm:$0xff] %vm87, %v152
    %v157 = vld [vmem:[#allocation5] sm:$0xff]
    %v158 = vld [vmem:[#allocation5 + $0x8] sm:$0xff]
    %vm159 = vcmask 130048
    %v160 = vsel %vm159, %v140, 0
    %v162 = vsel %vm159, %v142, 0
    %164 = vmatpush.msra.mxu0 0.0
    %165 = vmatpush.msra.mxu0 0.0
    %166 = vmatpush.msra.mxu0 0.0
    %167 = vmatpush.msra.mxu0 0.0
    %168 = vmatpush.msra.mxu0 0.0
    %169 = vmatpush.msra.mxu0 0.0
    %170 = vmatpush.msra.mxu0 0.0
    %171 = vmatpush.msra.mxu0 0.0
    %172 = vmatpush.msra.mxu0 0.0
    %173 = vmatpush.msra.mxu0 0.0
    %174 = vmatpush.msra.mxu0 0.0
    %175 = vmatpush.msra.mxu0 0.0
    %176 = vmatpush.msra.mxu0 0.0
    %177 = vmatpush.msra.mxu0 0.0
    %178 = vmatpush.msra.mxu0 %v158
    %179 = vmatpush.msra.mxu0 %v157
    %180 = vmatmul.f32.gmra.mxu0 %v160
    %v181 = vpop.f32.mrf.mxu0
    %v182 = vadd.f32 0.0, %v181
    %183 = vmatmul.f32.gmra.mxu0 %v162
    %v184 = vpop.f32.mrf.mxu0
    %v185 = vadd.f32 0.0, %v184
    %186 = vdwg.mxu0
    %v187 = vsel %vm87, %v182, -inf
    %188 = vmax.xlane.f32.xlu0 %v187
    %v189 = vpop.xlane.xlu0 %188
    %v190 = vsel %vm87, %v185, -inf
    %191 = vmax.xlane.f32.xlu0 %v190
    %v192 = vpop.xlane.xlu0 %191
    %193 = vrot.lane.b32.xlu0 %v121, 80
    %v194 = vpop.permute.xlu0 %193
    %195 = vrot.lane.b32.xlu0 %v122, 80
    %v196 = vpop.permute.xlu0 %195
    %v197 = vsel %vm159, %v194, 0
    %v199 = vsel %vm159, %v196, 0
    %201 = vmatpush.msra.mxu0 0.0
    %202 = vmatpush.msra.mxu0 0.0
    %203 = vmatpush.msra.mxu0 0.0
    %204 = vmatpush.msra.mxu0 0.0
    %205 = vmatpush.msra.mxu0 0.0
    %206 = vmatpush.msra.mxu0 0.0
    %207 = vmatpush.msra.mxu0 0.0
    %208 = vmatpush.msra.mxu0 0.0
    %209 = vmatpush.msra.mxu0 0.0
    %210 = vmatpush.msra.mxu0 0.0
    %211 = vmatpush.msra.mxu0 0.0
    %212 = vmatpush.msra.mxu0 0.0
    %213 = vmatpush.msra.mxu0 0.0
    %214 = vmatpush.msra.mxu0 0.0
    %215 = vmatpush.msra.mxu0 %v158
    %216 = vmatpush.msra.mxu0 %v157
    %217 = vmatmul.f32.gmra.mxu0 %v197
    %v218 = vpop.f32.mrf.mxu0
    %v219 = vadd.f32 0.0, %v218
    %220 = vmatmul.f32.gmra.mxu0 %v199
    %v221 = vpop.f32.mrf.mxu0
    %v222 = vadd.f32 0.0, %v221
    %223 = vdwg.mxu0
    %v224 = vsel %vm87, %v219, -inf
    %225 = vmax.xlane.f32.xlu0 %v224
    %v226 = vpop.xlane.xlu0 %225
    %v227 = vsel %vm87, %v222, -inf
    %228 = vmax.xlane.f32.xlu0 %v227
    %v229 = vpop.xlane.xlu0 %228
    %v230 = vmax.f32 %v189, %v226
    %v231 = vmax.f32 %v192, %v229
    %s232 = smul.u32 0, 16
    %v233 = vlaneseq
    %v234 = vshrl.u32 %v233, 7
    %v235 = vadd.s32 %v234, 8
    %v236 = vstv %s232
    %v237 = vadd.s32 %v236, %v234
    %v238 = vadd.s32 %v236, %v235
    %vm239 = vcmp.lt.s32.totalorder %v237, 16
    %vm240 = vcmp.lt.s32.totalorder %v238, 16
    %v241 = vsel %vm239, %v230, -inf
    %v242 = vsel %vm240, %v231, -inf
    %v243 = vmax.f32 %v241, %v242
    %v244 = vrot.slane %v243, 4
    %v245 = vmax.f32 %v243, %v244
    %v246 = vrot.slane %v245, 2
    %v247 = vmax.f32 %v245, %v246
    %v248 = vrot.slane %v247, 1
    %v249 = vmax.f32 %v247, %v248
    %250 = vst [vmem:[#allocation11] sm:$0xff] %v249
    // Predicated region
    $region30: #{tpu_custom_call.1} parent=1 // pred_check
      _
    $region31: #{tpu_custom_call.1} parent=1 // pred_check_branch
      %252 = sbr.rel (0) target = $region33
    $region32: #{tpu_custom_call.1} parent=1 // pred_region
      %254 = vsyncadd [#allocation4], 0
      %s255 = sshll.u32 [#allocation7], 4
      %s256 = int_to_ptr.vmem [resolvable:$true] %s255
      %s257 = sshll.u32 %s5, 4
      %s258 = int_to_ptr.hbm [resolvable:$true] %s257
      %263 = dma.vmem_to_hbm [thread:$0]  %s256, 256, %s258, [#allocation4], 128, 128, 8
    $region33: #{tpu_custom_call.1} parent=1 // pred_fallthru
      _
    // Predicated region
    $region34: #{tpu_custom_call.1} parent=1 // pred_check
      _
    $region35: #{tpu_custom_call.1} parent=1 // pred_check_branch
      %265 = sbr.rel (0) target = $region37
    $region36: #{tpu_custom_call.1} parent=1 // pred_region
      %267 = vsyncadd [#allocation9], 0
      %s268 = sshll.u32 [#allocation8], 4
      %s269 = int_to_ptr.vmem [resolvable:$true] %s268
      %s270 = sshll.u32 %s6, 4
      %s271 = int_to_ptr.hbm [resolvable:$true] %s270
      %276 = dma.vmem_to_hbm [thread:$0]  %s269, 256, %s271, [#allocation9], 128, 128, 8
    $region37: #{tpu_custom_call.1} parent=1 // pred_fallthru
      _
    // Predicated region
    $region38: #{tpu_custom_call.1} parent=1 // pred_check
      _
    $region39: #{tpu_custom_call.1} parent=1 // pred_check_branch
      %278 = sbr.rel (0) target = $region41
    $region40: #{tpu_custom_call.1} parent=1 // pred_region
      %280 = vsyncadd [#allocation9], 0
      %s281 = sshll.u32 [#allocation10], 4
      %s282 = int_to_ptr.vmem [resolvable:$true] %s281
      %s283 = sshll.u32 %s7, 4
      %s284 = int_to_ptr.hbm [resolvable:$true] %s283
      %289 = dma.vmem_to_hbm [thread:$0]  %s282, 256, %s284, [#allocation9], 128, 128, 8
    $region41: #{tpu_custom_call.1} parent=1 // pred_fallthru
      _
    // Predicated region
    $region42: #{tpu_custom_call.1} parent=1 // pred_check
      _
    $region43: #{tpu_custom_call.1} parent=1 // pred_check_branch
      %291 = sbr.rel (0) target = $region45
    $region44: #{tpu_custom_call.1} parent=1 // pred_region
      %293 = vsyncadd [#allocation12], 0
      %s295 = sshll.u32 [#allocation11], 4
      %s296 = int_to_ptr.vmem [resolvable:$true] %s295
      %s297 = sshll.u32 %s8, 4
      %s298 = int_to_ptr.hbm [resolvable:$true] %s297
      %300 = dma.vmem_to_hbm [thread:$0]  %s296, 128, %s298, [#allocation12]
    $region45: #{tpu_custom_call.1} parent=1 // pred_fallthru
      _
    // Predicated region
    $region46: #{tpu_custom_call.1} parent=1 // pred_check
      _
    $region47: #{tpu_custom_call.1} parent=1 // pred_check_branch
      %302 = sbr.rel (0) target = $region49
    $region48: #{tpu_custom_call.1} parent=1 // pred_region
      %304 = dma.done [#allocation4], 256
    $region49: #{tpu_custom_call.1} parent=1 // pred_fallthru
      _
    // Predicated region
    $region50: #{tpu_custom_call.1} parent=1 // pred_check
      _
    $region51: #{tpu_custom_call.1} parent=1 // pred_check_branch
      %306 = sbr.rel (0) target = $region53
    $region52: #{tpu_custom_call.1} parent=1 // pred_region
      %308 = dma.done [#allocation9], 256
    $region53: #{tpu_custom_call.1} parent=1 // pred_fallthru
      _
    // Predicated region
    $region54: #{tpu_custom_call.1} parent=1 // pred_check
      _
    $region55: #{tpu_custom_call.1} parent=1 // pred_check_branch
      %310 = sbr.rel (0) target = $region57
    $region56: #{tpu_custom_call.1} parent=1 // pred_region
      %312 = dma.done [#allocation9], 256
    $region57: #{tpu_custom_call.1} parent=1 // pred_fallthru
      _
    // Predicated region
    $region58: #{tpu_custom_call.1} parent=1 // pred_check
      _
    $region59: #{tpu_custom_call.1} parent=1 // pred_check_branch
      %314 = sbr.rel (0) target = $region61
    $region60: #{tpu_custom_call.1} parent=1 // pred_region
      %316 = dma.done [#allocation12], 128
    $region61: #{tpu_custom_call.1} parent=1 // pred_fallthru
      _
    %317 = vsyncpa [#allocation3], 1
    %318 = vsyncpa [#allocation6], 1
    %319 = vsyncpa [#allocation4], 1
    %320 = vsyncpa [#allocation9], 1
    %321 = vsyncpa [#allocation12], 1

</llo_original>
